<compile_context>
chip_gen: v5e
topology: v5e:2x2
jax: 0.10.0
libtpu: 0.0.40
codegen_flags: <defaults>
</compile_context>

<pallas_src>
import functools

import jax
import jax.numpy as jnp
from jax import lax
from jax.experimental import pallas as pl
from jax.experimental.pallas import tpu as pltpu


def _round_up(x, m):
    return ((x + m - 1) // m) * m


def _vmem_capacity_bytes():
    try:
        return int(pltpu.get_tpu_info().vmem_capacity_bytes)
    except Exception:
        return 64 * 1024 * 1024  # conservative fallback (v7x per-TC VMEM)


def _per_row_vmem_bytes(n_classes, s_itemsize, t_itemsize):
    # Double-buffered inputs (student + teacher + labels) plus ~6 full-width (TB, C)
    # f32 temporaries live in the body (f32 casts, exps, log_q, products).
    return (2 * (n_classes * (s_itemsize + t_itemsize) + 4)
            + 6 * n_classes * 4)


def _choose_tile_b(batch, n_classes, s_itemsize, t_itemsize):
    """Pick a batch tile (multiple of 8) from a per-generation VMEM budget."""
    vmem_cap = _vmem_capacity_bytes()
    budget = min(int(vmem_cap * 0.6), 96 * 1024 * 1024)
    per_row = _per_row_vmem_bytes(n_classes, s_itemsize, t_itemsize)
    tb = budget // max(per_row, 1)
    tb = max(8, (tb // 8) * 8)
    tb = min(tb, 2048)
    tb = min(tb, _round_up(batch, 8))
    return tb


def _vmem_limit_for(tile_b, n_classes, s_itemsize, t_itemsize):
    vmem_cap = _vmem_capacity_bytes()
    need = _per_row_vmem_bytes(n_classes, s_itemsize, t_itemsize) * tile_b + (8 << 20)
    need = max(need, 32 << 20)
    return int(min(need, int(vmem_cap * 0.9)))


def _distill_loss_kernel(s_ref, t_ref, lab_ref, out_ref, *,
                         inv_temp, temperature, alpha, total_b, tile_b, need_mask):
    """Processes one (TB, C) batch tile and writes its un-normalized partial loss sum.

    s_ref  : (TB, C) student logits (any float dtype), VMEM
    t_ref  : (TB, C) teacher logits (any float dtype), VMEM
    lab_ref: (TB, 1) int32 labels, VMEM
    out_ref: (8, 128) f32 per-tile partial-sum block (lane-dense, unmasked store)
    """
    step = pl.program_id(0)

    s = s_ref[...].astype(jnp.float32)          # (TB, C)
    t = t_ref[...].astype(jnp.float32)          # (TB, C)
    labels = lab_ref[...]                       # (TB, 1) int32
    col_ids = lax.broadcasted_iota(jnp.int32, s.shape, 1)

    # Shifted student logits, shared by the CE and tempered-KL branches.
    s_max = jnp.max(s, axis=1, keepdims=True)
    s_sh = s - s_max                                                            # (TB, C)

    # ---- CE(student_logits, labels): s_max cancels, so gather on s_sh directly ----
    lse_s = jnp.log(jnp.sum(jnp.exp(s_sh), axis=1, keepdims=True))              # (TB, 1)
    gathered = jnp.sum(jnp.where(col_ids == labels, s_sh, 0.0),
                       axis=1, keepdims=True)                                   # (TB, 1)
    ce_row = lse_s - gathered                                                    # (TB, 1)

    # ---- Tempered student log-softmax: inv_temp > 0 => max(s/T) = s_max/T, so the
    # shifted tempered logits are just s_sh * inv_temp (no extra max/sub pass). ----
    s_t_sh = s_sh * inv_temp
    log_q = s_t_sh - jnp.log(jnp.sum(jnp.exp(s_t_sh), axis=1, keepdims=True))    # (TB, C)

    # ---- KL(softmax(t/T) || softmax(s/T)) per row (PyTorch KLDivLoss convention).
    # Divides / logs touch only (TB, 1) row vectors, never a full (TB, C) tile. ----
    t_t = t * inv_temp
    t_t_sh = t_t - jnp.max(t_t, axis=1, keepdims=True)
    t_exp = jnp.exp(t_t_sh)                                                      # (TB, C)
    t_sum = jnp.sum(t_exp, axis=1, keepdims=True)                                # (TB, 1)
    inner = jnp.sum(t_exp * (t_t_sh - log_q), axis=1, keepdims=True)             # (TB, 1)
    kl_row = inner / t_sum - jnp.log(t_sum)                                      # (TB, 1)

    loss_row = (1.0 - alpha) * ce_row + (alpha * temperature * temperature) * kl_row

    if need_mask:
        # Last tile may extend past B: zero padded rows before they enter the partial
        # sum (where-select kills any NaN/Inf from out-of-bounds garbage too).
        row_ids = step * tile_b + lax.broadcasted_iota(jnp.int32, (tile_b, 1), 0)
        loss_row = jnp.where(row_ids < total_b, loss_row, 0.0)

    # Per-tile partial sum stored as a lane-dense (8, 128) block -> no carried state,
    # so the batch grid axis can be "parallel" (both TensorCores on v7x).
    partial = jnp.sum(loss_row)
    out_ref[...] = jnp.full((8, 128), partial, dtype=jnp.float32)


def distillation_loss(student_logits, teacher_logits, labels,
                      temperature=3.0, alpha=0.5, tile_b=None):
    """JAX wrapper mirroring DistillationLoss.forward.

    Logits may be f32 or bf16 (feeding bf16 halves HBM traffic; the kernel casts to f32
    on load). Final 1/B normalization of the per-tile partial sums happens here.
    """
    B, C = student_logits.shape
    labels2d = labels.astype(jnp.int32).reshape(B, 1)

    s_item = jnp.dtype(student_logits.dtype).itemsize
    t_item = jnp.dtype(teacher_logits.dtype).itemsize

    if tile_b is None:
        tile_b = _choose_tile_b(B, C, s_item, t_item)
    tile_b = max(8, (int(tile_b) // 8) * 8)
    num_tiles = pl.cdiv(B, tile_b)
    need_mask = (B % tile_b) != 0
    vmem_limit = _vmem_limit_for(tile_b, C, s_item, t_item)

    kernel = functools.partial(
        _distill_loss_kernel,
        inv_temp=1.0 / float(temperature),
        temperature=float(temperature),
        alpha=float(alpha),
        total_b=B,
        tile_b=tile_b,
        need_mask=need_mask,
    )

    cost = pl.CostEstimate(
        flops=int(15 * B * C),
        transcendentals=int(3 * B * C),
        bytes_accessed=int(B * C * (s_item + t_item) + B * 4 + num_tiles * 8 * 128 * 4),
    )

    out = pl.pallas_call(
        kernel,
        out_shape=jax.ShapeDtypeStruct((num_tiles * 8, 128), jnp.float32),
        grid=(num_tiles,),
        in_specs=[
            pl.BlockSpec((tile_b, C), lambda i: (i, 0)),
            pl.BlockSpec((tile_b, C), lambda i: (i, 0)),
            pl.BlockSpec((tile_b, 1), lambda i: (i, 0)),
        ],
        out_specs=pl.BlockSpec((8, 128), lambda i: (i, 0)),
        compiler_params=pltpu.CompilerParams(
            # No carried accumulator -> batch axis is truly parallel (v7x: 2 TCs/chip).
            dimension_semantics=("parallel",),
            vmem_limit_bytes=vmem_limit,
        ),
        cost_estimate=cost,
    )(student_logits, teacher_logits, labels2d)

    partials = out.reshape(num_tiles, 8, 128)[:, 0, 0]     # one scalar per tile
    return jnp.sum(partials) / float(B)


def _reference(student_logits, teacher_logits, labels, temperature=3.0, alpha=0.5):
    """Pure-JAX reference for sanity checking."""
    s = student_logits.astype(jnp.float32)
    t = teacher_logits.astype(jnp.float32)
    log_q = jax.nn.log_softmax(s / temperature, axis=1)
    p = jax.nn.softmax(t / temperature, axis=1)
    log_p = jax.nn.log_softmax(t / temperature, axis=1)
    loss_kl = jnp.sum(p * (log_p - log_q)) / s.shape[0]
    log_sm = jax.nn.log_softmax(s, axis=1)
    loss_ce = -jnp.mean(jnp.take_along_axis(log_sm, labels[:, None], axis=1))
    return (1.0 - alpha) * loss_ce + alpha * temperature * temperature * loss_kl


if __name__ == "__main__":
    key = jax.random.PRNGKey(0)
    k1, k2, k3, k4, k5, k6 = jax.random.split(key, 6)

    # ---- Test 1: small shapes, single grid step, f32 ----
    B, C = 8, 32
    s1 = jax.random.normal(k1, (B, C), dtype=jnp.float32)
    t1 = jax.random.normal(k2, (B, C), dtype=jnp.float32)
    y1 = jax.random.randint(k3, (B,), 0, C, dtype=jnp.int32)

    loss1 = jax.block_until_ready(distillation_loss(s1, t1, y1, 3.0, 0.5))
    ref1 = _reference(s1, t1, y1, 3.0, 0.5)
    assert jnp.allclose(loss1, ref1, rtol=1e-4, atol=1e-5), (loss1, ref1)

    # ---- Test 2: multi-step grid with ragged last tile (B % TB != 0), forced TB=8 ----
    B2, C2 = 20, 160
    s2 = jax.random.normal(k4, (B2, C2), dtype=jnp.float32)
    t2 = jax.random.normal(k5, (B2, C2), dtype=jnp.float32)
    y2 = jax.random.randint(k6, (B2,), 0, C2, dtype=jnp.int32)

    loss2 = jax.block_until_ready(distillation_loss(s2, t2, y2, 3.0, 0.5, tile_b=8))
    ref2 = _reference(s2, t2, y2, 3.0, 0.5)
    assert jnp.allclose(loss2, ref2, rtol=1e-4, atol=1e-5), (loss2, ref2)

    # ---- Test 3: bf16 logits fed directly (no wrapper up-cast), loose tolerance ----
    s3 = s1.astype(jnp.bfloat16)
    t3 = t1.astype(jnp.bfloat16)
    loss3 = jax.block_until_ready(distillation_loss(s3, t3, y1, 3.0, 0.5))
    ref3 = _reference(s3, t3, y1, 3.0, 0.5)
    assert jnp.allclose(loss3, ref3, rtol=5e-3, atol=5e-3), (loss3, ref3)

    print("KERNEL_OK")
</pallas_src>

<mosaic_0001>
module attributes {stable_mosaic.version = 11 : i64} {
  func.func @_distill_loss_kernel(%arg0: i32, %arg1: memref<8x32xf32, #tpu.memory_space<vmem>>, %arg2: memref<8x32xf32, #tpu.memory_space<vmem>>, %arg3: memref<8x1xi32, #tpu.memory_space<vmem>>, %arg4: memref<8x128xf32, #tpu.memory_space<vmem>>) attributes {dimension_semantics = [#tpu.dimension_semantics<parallel>], iteration_bounds = array<i64: 1>, scalar_prefetch = 0 : i64, scratch_operands = 0 : i64, tpu.core_type = #tpu.core_type<tc>, window_params = [{transform_indices = @transform_0, window_bounds = array<i64: 8, 32>}, {transform_indices = @transform_1, window_bounds = array<i64: 8, 32>}, {transform_indices = @transform_2, window_bounds = array<i64: 8, 1>}, {transform_indices = @transform_3, window_bounds = array<i64: 8, 128>}]} {
    %c0 = arith.constant 0 : index
    %c0_0 = arith.constant 0 : index
    %0 = vector.load %arg1[%c0, %c0_0] : memref<8x32xf32, #tpu.memory_space<vmem>>, vector<8x32xf32>
    %c0_1 = arith.constant 0 : index
    %c0_2 = arith.constant 0 : index
    %1 = vector.load %arg2[%c0_1, %c0_2] : memref<8x32xf32, #tpu.memory_space<vmem>>, vector<8x32xf32>
    %c0_3 = arith.constant 0 : index
    %c0_4 = arith.constant 0 : index
    %2 = vector.load %arg3[%c0_3, %c0_4] : memref<8x1xi32, #tpu.memory_space<vmem>>, vector<8x1xi32>
    %3 = tpu.iota {dimensions = array<i32: 1>} : vector<8x32xi32>
    %cst = arith.constant dense<0xFF800000> : vector<8xf32>
    %4 = vector.multi_reduction <maximumf>, %0, %cst [1] : vector<8x32xf32> to vector<8xf32>
    %5 = vector.shape_cast %4 : vector<8xf32> to vector<8x1xf32>
    %6 = vector.broadcast %5 : vector<8x1xf32> to vector<8x32xf32>
    %7 = arith.subf %0, %6 : vector<8x32xf32>
    %8 = math.exp %7 : vector<8x32xf32>
    %cst_5 = arith.constant dense<0.000000e+00> : vector<8xf32>
    %9 = vector.multi_reduction <add>, %8, %cst_5 [1] : vector<8x32xf32> to vector<8xf32>
    %10 = vector.shape_cast %9 : vector<8xf32> to vector<8x1xf32>
    %11 = math.log %10 : vector<8x1xf32>
    %12 = vector.broadcast %2 : vector<8x1xi32> to vector<8x32xi32>
    %13 = arith.cmpi eq, %3, %12 : vector<8x32xi32>
    %cst_6 = arith.constant 0.000000e+00 : f32
    %14 = vector.broadcast %cst_6 : f32 to vector<8x32xf32>
    %15 = arith.select %13, %7, %14 : vector<8x32xi1>, vector<8x32xf32>
    %cst_7 = arith.constant dense<0.000000e+00> : vector<8xf32>
    %16 = vector.multi_reduction <add>, %15, %cst_7 [1] : vector<8x32xf32> to vector<8xf32>
    %17 = vector.shape_cast %16 : vector<8xf32> to vector<8x1xf32>
    %18 = arith.subf %11, %17 : vector<8x1xf32>
    %cst_8 = arith.constant 0.333333343 : f32
    %19 = vector.broadcast %cst_8 : f32 to vector<8x32xf32>
    %20 = arith.mulf %7, %19 : vector<8x32xf32>
    %21 = math.exp %20 : vector<8x32xf32>
    %cst_9 = arith.constant dense<0.000000e+00> : vector<8xf32>
    %22 = vector.multi_reduction <add>, %21, %cst_9 [1] : vector<8x32xf32> to vector<8xf32>
    %23 = vector.shape_cast %22 : vector<8xf32> to vector<8x1xf32>
    %24 = math.log %23 : vector<8x1xf32>
    %25 = vector.broadcast %24 : vector<8x1xf32> to vector<8x32xf32>
    %26 = arith.subf %20, %25 : vector<8x32xf32>
    %cst_10 = arith.constant 0.333333343 : f32
    %27 = vector.broadcast %cst_10 : f32 to vector<8x32xf32>
    %28 = arith.mulf %1, %27 : vector<8x32xf32>
    %cst_11 = arith.constant dense<0xFF800000> : vector<8xf32>
    %29 = vector.multi_reduction <maximumf>, %28, %cst_11 [1] : vector<8x32xf32> to vector<8xf32>
    %30 = vector.shape_cast %29 : vector<8xf32> to vector<8x1xf32>
    %31 = vector.broadcast %30 : vector<8x1xf32> to vector<8x32xf32>
    %32 = arith.subf %28, %31 : vector<8x32xf32>
    %33 = math.exp %32 : vector<8x32xf32>
    %cst_12 = arith.constant dense<0.000000e+00> : vector<8xf32>
    %34 = vector.multi_reduction <add>, %33, %cst_12 [1] : vector<8x32xf32> to vector<8xf32>
    %35 = vector.shape_cast %34 : vector<8xf32> to vector<8x1xf32>
    %36 = arith.subf %32, %26 : vector<8x32xf32>
    %37 = arith.mulf %33, %36 : vector<8x32xf32>
    %cst_13 = arith.constant dense<0.000000e+00> : vector<8xf32>
    %38 = vector.multi_reduction <add>, %37, %cst_13 [1] : vector<8x32xf32> to vector<8xf32>
    %39 = vector.shape_cast %38 : vector<8xf32> to vector<8x1xf32>
    %40 = arith.divf %39, %35 : vector<8x1xf32>
    %41 = math.log %35 : vector<8x1xf32>
    %42 = arith.subf %40, %41 : vector<8x1xf32>
    %cst_14 = arith.constant 5.000000e-01 : f32
    %43 = vector.broadcast %cst_14 : f32 to vector<8x1xf32>
    %44 = arith.mulf %43, %18 : vector<8x1xf32>
    %cst_15 = arith.constant 4.500000e+00 : f32
    %45 = vector.broadcast %cst_15 : f32 to vector<8x1xf32>
    %46 = arith.mulf %45, %42 : vector<8x1xf32>
    %47 = arith.addf %44, %46 : vector<8x1xf32>
    %48 = vector.shape_cast %47 : vector<8x1xf32> to vector<1x8x1xf32>
    %cst_16 = arith.constant dense<0.000000e+00> : vector<1xf32>
    %49 = vector.multi_reduction <add>, %48, %cst_16 [1, 2] : vector<1x8x1xf32> to vector<1xf32>
    %50 = vector.shape_cast %49 : vector<1xf32> to vector<1x1x1xf32>
    %51 = vector.extract %50[0, 0, 0] : f32 from vector<1x1x1xf32>
    %52 = vector.broadcast %51 : f32 to vector<8x128xf32>
    %c0_17 = arith.constant 0 : index
    %c0_18 = arith.constant 0 : index
    %53 = vector.load %arg4[%c0_17, %c0_18] : memref<8x128xf32, #tpu.memory_space<vmem>>, vector<8x128xf32>
    tpu.vector_store %arg4[%c0_17, %c0_18], %52 {strides = array<i32>} : memref<8x128xf32, #tpu.memory_space<vmem>>, vector<8x128xf32>,
    return
  }
  func.func @transform_0(%arg0: i32) -> (i32, i32) {
    %c0_i32 = arith.constant 0 : i32
    %c0_i32_0 = arith.constant 0 : i32
    return %arg0, %c0_i32 : i32, i32
  }
  func.func @transform_1(%arg0: i32) -> (i32, i32) {
    %c0_i32 = arith.constant 0 : i32
    %c0_i32_0 = arith.constant 0 : i32
    return %arg0, %c0_i32 : i32, i32
  }
  func.func @transform_2(%arg0: i32) -> (i32, i32) {
    %c0_i32 = arith.constant 0 : i32
    %c0_i32_0 = arith.constant 0 : i32
    return %arg0, %c0_i32 : i32, i32
  }
  func.func @transform_3(%arg0: i32) -> (i32, i32) {
    %c0_i32 = arith.constant 0 : i32
    %c0_i32_0 = arith.constant 0 : i32
    return %arg0, %c0_i32 : i32, i32
  }
}

</mosaic_0001>

<llo_original>
// kernel: tpu_custom_call.1
$region0: #{tpu_custom_call.1}
  #allocation0 [shape = 'u32[]', space=smem, size = 0x4, offset = 0x4, fixed_abs, tag = 'smem constant byte address 0x4 - core index']
  #allocation1 [shape = 'u32[72,128]{1,0:T(1,128)}', space=vmem, size = 0x9000, scoped, tag = 'internal scratch']
  %s0 = inlined_call_operand.vmem [shape: f32[8,32], index: 0, kind: input, shape index: {}]
  %s1 = inlined_call_operand.hbm [shape: f32[8,32], index: 1, kind: input, shape index: {}]
  %s2 = inlined_call_operand.vmem [shape: s32[8,1], index: 2, kind: input, shape index: {}]
  %s3 = inlined_call_operand.hbm [shape: f32[8,128], index: 3, kind: output, shape index: {}]
  %s4 = sld [smem:[#allocation0]]
  $region26: #{tpu_custom_call.1} parent=0
    _
  %s6 = ssub.s32 1, %s4
  %s7 = scalar_select 0, %s6, %s4
  $region1: #{tpu_custom_call.1} parent=0
    #allocation2 [shape = 'u8[4096]{0}', space=vmem, size = 0x1000, scoped, tag = 'input window, operand 1, single buffered']
    #allocation3 [shape = 's32[1]{0}', space=sflag, size = 0x4, scoped, tag = 'scoped memory for tpu_custom_call.1']
    #allocation4 [shape = 's32[1]{0}', space=sflag, size = 0x4, scoped, tag = 'scoped memory for tpu_custom_call.1']
    #allocation5 [shape = 'u8[4096]{0}', space=vmem, size = 0x1000, scoped, tag = 'output window, operand 0, single buffered']
    %8 = vsyncpa [#allocation3], 0
    %9 = vsyncpa [#allocation4], 0
    // Predicated region
    $region2: #{tpu_custom_call.1} parent=1 // pred_check
      _
    $region3: #{tpu_custom_call.1} parent=1 // pred_check_branch
      %11 = sbr.rel (0) target = $region5
    $region4: #{tpu_custom_call.1} parent=1 // pred_region
      _
    $region5: #{tpu_custom_call.1} parent=1 // pred_fallthru
      _
    // Predicated region
    $region6: #{tpu_custom_call.1} parent=1 // pred_check
      _
    $region7: #{tpu_custom_call.1} parent=1 // pred_check_branch
      %13 = sbr.rel (0) target = $region9
    $region8: #{tpu_custom_call.1} parent=1 // pred_region
      %15 = vsyncadd [#allocation3], 0
      %s17 = sshll.u32 %s1, 4
      %s18 = int_to_ptr.hbm [resolvable:$true] %s17
      %s19 = sshll.u32 [#allocation2], 4
      %s20 = int_to_ptr.vmem [resolvable:$true] %s19
      %22 = dma.hbm_to_vmem [thread:$0]  %s18, 128, %s20, [#allocation3]
    $region9: #{tpu_custom_call.1} parent=1 // pred_fallthru
      _
    // Predicated region
    $region10: #{tpu_custom_call.1} parent=1 // pred_check
      _
    $region11: #{tpu_custom_call.1} parent=1 // pred_check_branch
      %24 = sbr.rel (0) target = $region13
    $region12: #{tpu_custom_call.1} parent=1 // pred_region
      _
    $region13: #{tpu_custom_call.1} parent=1 // pred_fallthru
      _
    // Predicated region
    $region14: #{tpu_custom_call.1} parent=1 // pred_check
      _
    $region15: #{tpu_custom_call.1} parent=1 // pred_check_branch
      %26 = sbr.rel (0) target = $region17
    $region16: #{tpu_custom_call.1} parent=1 // pred_region
      %28 = dma.done [#allocation3], 128
    $region17: #{tpu_custom_call.1} parent=1 // pred_fallthru
      _
    %v29 = vld [vmem:[%s0] sm:$0xff]
    %v30 = vld [vmem:[#allocation2] sm:$0xff]
    %v31 = vld [vmem:[%s2] sm:$0xff]
    %v32 = vlaneseq
    %v33 = vand.u32 %v32, 127
    %vm34 = vcmask 261120
    %v35 = vsel %vm34, %v29, -inf
    %36 = vmax.xlane.f32.xlu0 %v35
    %v37 = vpop.xlane.xlu0 %36
    %v38 = vsub.f32 %v29, %v37
    %v39 = vmul.f32 %v38, 1.442695
    %v40 = vpow.pop %v39
    %v41 = vsel %vm34, %v40, 0.0
    %42 = vadd.xlane.f32.xlu0 %v41
    %v43 = vpop.xlane.xlu0 %42
    %v44 = vlog2.pop %v43
    %v45 = vmul.f32 %v44, 0.6931472
    %46 = vset.pattern.permute.xlu0 0
    %47 = vperm.xlu0 %46, %v31
    %v48 = vpop.permute.xlu0 %47
    %vm49 = vcmp.eq.s32.totalorder %v33, %v48
    %v50 = vsel %vm49, %v38, 0.0
    %v51 = vsel %vm34, %v50, 0.0
    %52 = vadd.xlane.f32.xlu0 %v51
    %v53 = vpop.xlane.xlu0 %52
    %v54 = vsub.f32 %v45, %v53
    %v55 = vmul.f32 %v38, 0.33333334
    %v56 = vmul.f32 %v55, 1.442695
    %v57 = vpow.pop %v56
    %v58 = vsel %vm34, %v57, 0.0
    %59 = vadd.xlane.f32.xlu0 %v58
    %v60 = vpop.xlane.xlu0 %59
    %v61 = vlog2.pop %v60
    %v62 = vmul.f32 %v61, 0.6931472
    %v63 = vsub.f32 %v55, %v62
    %v64 = vmul.f32 %v30, 0.33333334
    %v65 = vsel %vm34, %v64, -inf
    %66 = vmax.xlane.f32.xlu0 %v65
    %v67 = vpop.xlane.xlu0 %66
    %v68 = vsub.f32 %v64, %v67
    %v69 = vmul.f32 %v68, 1.442695
    %v70 = vpow.pop %v69
    %v71 = vsel %vm34, %v70, 0.0
    %72 = vadd.xlane.f32.xlu0 %v71
    %v73 = vpop.xlane.xlu0 %72
    %v74 = vsub.f32 %v68, %v63
    %v75 = vmul.f32 %v70, %v74
    %v76 = vsel %vm34, %v75, 0.0
    %77 = vadd.xlane.f32.xlu0 %v76
    %v78 = vpop.xlane.xlu0 %77
    %v79 = vrcp.pop %v73
    %v80 = vmul.f32 %v73, %v79
    %v81 = vsub.f32 1.0, %v80
    %v82 = vmul.f32 %v79, %v81
    %v83 = vadd.f32 %v79, %v82
    %vm84 = vweird.f32 %v73
    %vm85 = vweird.f32 %v79
    %vm86 = vmor %vm84, %vm85
    %v87 = vsel %vm86, %v79, %v83
    %v88 = vand.u32 2147483647, %v73
    %vm89 = vcmp.eq.f32.partialorder %v88, 8.507059e+37
    %v90 = vand.u32 %v73, 2147483648
    %v91 = vor.u32 1.1754944e-38, %v90
    %v92 = vsel %vm89, %v91, %v87
    %v93 = vmul.f32 %v78, %v92
    %v94 = vlog2.pop %v73
    %v95 = vmul.f32 %v94, 0.6931472
    %v96 = vsub.f32 %v93, %v95
    %v97 = vmul.f32 %v54, 0.5
    %v98 = vmul.f32 %v96, 4.5
    %v99 = vadd.f32 %v97, %v98
    %vm100 = vcmask 7168
    %v101 = vsel %vm100, %v99, 0.0
    %102 = vadd.xlane.f32.xlu0 %v101
    %v103 = vpop.xlane.xlu0 %102
    %v104 = vrot.slane %v103, 4
    %v105 = vadd.f32 %v103, %v104
    %v106 = vrot.slane %v105, 2
    %v107 = vadd.f32 %v105, %v106
    %v108 = vrot.slane %v107, 1
    %v109 = vadd.f32 %v107, %v108
    %s110 = vtos %v109
    %v111 = vstv %s110
    %112 = vst [vmem:[#allocation5] sm:$0xff] %v111
    // Predicated region
    $region18: #{tpu_custom_call.1} parent=1 // pred_check
      _
    $region19: #{tpu_custom_call.1} parent=1 // pred_check_branch
      %114 = sbr.rel (0) target = $region21
    $region20: #{tpu_custom_call.1} parent=1 // pred_region
      %116 = vsyncadd [#allocation4], 0
      %s118 = sshll.u32 [#allocation5], 4
      %s119 = int_to_ptr.vmem [resolvable:$true] %s118
      %s120 = sshll.u32 %s3, 4
      %s121 = int_to_ptr.hbm [resolvable:$true] %s120
      %123 = dma.vmem_to_hbm [thread:$0]  %s119, 128, %s121, [#allocation4]
    $region21: #{tpu_custom_call.1} parent=1 // pred_fallthru
      _
    // Predicated region
    $region22: #{tpu_custom_call.1} parent=1 // pred_check
      _
    $region23: #{tpu_custom_call.1} parent=1 // pred_check_branch
      %125 = sbr.rel (0) target = $region25
    $region24: #{tpu_custom_call.1} parent=1 // pred_region
      %127 = dma.done [#allocation4], 128
    $region25: #{tpu_custom_call.1} parent=1 // pred_fallthru
      _
    %128 = vsyncpa [#allocation3], 1
    %129 = vsyncpa [#allocation4], 1

</llo_original>
